<compile_context>
chip_gen: v6e
topology: v6e:2x2x1
jax: 0.10.0
libtpu: 0.0.40
codegen_flags: <defaults>
</compile_context>

<pallas_src>
import functools

import jax
import jax.numpy as jnp
from jax.experimental import pallas as pl
from jax.experimental.pallas import tpu as pltpu


def _divbd_kernel(x_ref, o_ref, *, total_b, tb):
    blk = pl.program_id(0)

    x = x_ref[...].astype(jnp.float32)                      # (TB, G, D)

    # Row-wise L2 normalize (torch.nn.functional.normalize, eps=1e-12):
    # rsqrt(max(||x||^2, 1e-24)) == 1 / max(||x||, 1e-12)
    sq = jnp.sum(x * x, axis=-1, keepdims=True)             # (TB, G, 1)
    inv = jax.lax.rsqrt(jnp.maximum(sq, jnp.float32(1e-24)))
    xn = x * inv                                            # (TB, G, D)

    # Per-sample sum of off-diagonal cosine similarities:
    #   sum_{g!=h} <xn_g, xn_h> = ||sum_g xn_g||^2 - sum_g ||xn_g||^2
    s = jnp.sum(xn, axis=1)                                 # (TB, D)
    ss = jnp.sum(s * s, axis=-1, keepdims=True)             # (TB, 1)
    # ||xn_g||^2 = sq_g * inv_g^2  (exact; avoids a (TB,G,D) mul + D-reduce).
    dd = jnp.sum(sq * inv * inv, axis=1)                    # (TB, 1)
    per_sample = ss - dd                                    # (TB, 1)

    # Mask padding rows of the (possibly partial) last block. Padded rows may
    # hold unspecified data; jnp.where selects, so NaN/Inf there cannot leak.
    row = blk * tb + jax.lax.broadcasted_iota(jnp.int32, (tb, 1), 0)
    per_sample = jnp.where(row < total_b, per_sample, jnp.float32(0.0))

    partial = jnp.sum(per_sample)
    # Lane-dense (1,128) output block; wrapper reads column 0.
    o_ref[...] = jnp.full((1, 128), partial, dtype=jnp.float32)


def div_bd(batch, *, block_samples=None, target_block_bytes=2 << 20):
    """Pallas port of DivBD.forward.

    batch: (B, G, D) array. Returns scalar f32 diversity loss.
    Non-3-D input (or G <= 1) returns 0.0, matching the PyTorch else-branch.
    """
    if batch.ndim != 3 or batch.shape[1] <= 1:
        return jnp.float32(0.0)

    B, G, D = batch.shape
    itemsize = jnp.dtype(batch.dtype).itemsize

    if block_samples is None:
        per_sample_bytes = max(1, G * D * itemsize)
        # ~2 MiB tiles: big enough to amortize per-step overhead (~0.35 us),
        # small enough (double-buffered) to fit the default scoped-VMEM limit
        # on every generation (v5e/v6e/v7x).
        block_samples = max(1, target_block_bytes // per_sample_bytes)
    tb = int(min(int(block_samples), B))
    num_blocks = -(-B // tb)

    partials = pl.pallas_call(
        functools.partial(_divbd_kernel, total_b=B, tb=tb),
        out_shape=jax.ShapeDtypeStruct((num_blocks, 128), jnp.float32),
        grid_spec=pltpu.PrefetchScalarGridSpec(
            num_scalar_prefetch=0,
            grid=(num_blocks,),
            in_specs=[pl.BlockSpec((tb, G, D), lambda b: (b, 0, 0))],
            out_specs=pl.BlockSpec((1, 128), lambda b: (b, 0)),
        ),
        compiler_params=pltpu.CompilerParams(
            dimension_semantics=("parallel",)),
    )(batch)

    return jnp.sum(partials[:, 0]) / jnp.float32(B * G * (G - 1))


def _div_bd_ref(batch):
    """Pure-JAX reference (masked Gram formulation) for verification."""
    x = batch.astype(jnp.float32)
    xn = x / jnp.maximum(
        jnp.sqrt(jnp.sum(x * x, axis=-1, keepdims=True)), 1e-12)
    sim = jnp.einsum("bgd,bhd->bgh", xn, xn)
    g = sim.shape[1]
    mask = 1.0 - jnp.eye(g, dtype=jnp.float32)
    return jnp.sum(sim * mask) / (sim.shape[0] * g * (g - 1))


if __name__ == "__main__":
    key = jax.random.PRNGKey(0)
    B, G, D = 10, 4, 128
    batch = jax.random.normal(key, (B, G, D), dtype=jnp.float32)

    ref = _div_bd_ref(batch)

    # Default blocking (single block here).
    loss = jax.block_until_ready(div_bd(batch))
    assert jnp.allclose(loss, ref, atol=1e-5, rtol=1e-4), (loss, ref)

    # Multi-block path with a ragged tail (blocks of 4, 4, 2 samples).
    loss_blk = jax.block_until_ready(div_bd(batch, block_samples=4))
    assert jnp.allclose(loss_blk, ref, atol=1e-5, rtol=1e-4), (loss_blk, ref)

    # bf16 input stays bf16 through the DMA; upcast happens in-kernel.
    batch_bf16 = batch.astype(jnp.bfloat16)
    loss_bf16 = jax.block_until_ready(div_bd(batch_bf16, block_samples=4))
    ref_bf16 = _div_bd_ref(batch_bf16)
    assert jnp.allclose(loss_bf16, ref_bf16, atol=1e-4, rtol=1e-3), (
        loss_bf16, ref_bf16)

    # else-branch behaviour (non-3-D input -> 0.0).
    flat = batch.reshape(B, G * D)
    assert float(div_bd(flat)) == 0.0

    print("KERNEL_OK")
</pallas_src>

<mosaic_0001>
module attributes {stable_mosaic.version = 11 : i64} {
  func.func @_divbd_kernel(%arg0: i32, %arg1: memref<10x4x128xf32, #tpu.memory_space<vmem>>, %arg2: memref<1x128xf32, #tpu.memory_space<vmem>>) attributes {dimension_semantics = [#tpu.dimension_semantics<parallel>], iteration_bounds = array<i64: 1>, scalar_prefetch = 0 : i64, scratch_operands = 0 : i64, tpu.core_type = #tpu.core_type<tc>, window_params = [{transform_indices = @transform_0, window_bounds = array<i64: 10, 4, 128>}, {transform_indices = @transform_1, window_bounds = array<i64: 1, 128>}]} {
    %c0 = arith.constant 0 : index
    %c0_0 = arith.constant 0 : index
    %c0_1 = arith.constant 0 : index
    %0 = vector.load %arg1[%c0, %c0_0, %c0_1] : memref<10x4x128xf32, #tpu.memory_space<vmem>>, vector<10x4x128xf32>
    %1 = arith.mulf %0, %0 : vector<10x4x128xf32>
    %cst = arith.constant dense<0.000000e+00> : vector<10x4xf32>
    %2 = vector.multi_reduction <add>, %1, %cst [2] : vector<10x4x128xf32> to vector<10x4xf32>
    %3 = vector.shape_cast %2 : vector<10x4xf32> to vector<10x4x1xf32>
    %cst_2 = arith.constant 1.000000e-24 : f32
    %4 = vector.broadcast %cst_2 : f32 to vector<10x4x1xf32>
    %5 = arith.maximumf %3, %4 : vector<10x4x1xf32>
    %6 = math.rsqrt %5 : vector<10x4x1xf32>
    %7 = vector.broadcast %6 : vector<10x4x1xf32> to vector<10x4x128xf32>
    %8 = arith.mulf %0, %7 : vector<10x4x128xf32>
    %cst_3 = arith.constant dense<0.000000e+00> : vector<10x128xf32>
    %9 = vector.multi_reduction <add>, %8, %cst_3 [1] : vector<10x4x128xf32> to vector<10x128xf32>
    %10 = arith.mulf %9, %9 : vector<10x128xf32>
    %cst_4 = arith.constant dense<0.000000e+00> : vector<10xf32>
    %11 = vector.multi_reduction <add>, %10, %cst_4 [1] : vector<10x128xf32> to vector<10xf32>
    %12 = vector.shape_cast %11 : vector<10xf32> to vector<10x1xf32>
    %13 = arith.mulf %3, %6 : vector<10x4x1xf32>
    %14 = arith.mulf %13, %6 : vector<10x4x1xf32>
    %cst_5 = arith.constant dense<0.000000e+00> : vector<10x1xf32>
    %15 = vector.multi_reduction <add>, %14, %cst_5 [1] : vector<10x4x1xf32> to vector<10x1xf32>
    %16 = arith.subf %12, %15 : vector<10x1xf32>
    %c10_i32 = arith.constant 10 : i32
    %17 = arith.muli %arg0, %c10_i32 : i32
    %18 = tpu.iota {dimensions = array<i32: 0>} : vector<10x1xi32>
    %19 = vector.broadcast %17 : i32 to vector<10x1xi32>
    %20 = arith.addi %19, %18 : vector<10x1xi32>
    %c10_i32_6 = arith.constant 10 : i32
    %21 = vector.broadcast %c10_i32_6 : i32 to vector<10x1xi32>
    %22 = arith.cmpi slt, %20, %21 : vector<10x1xi32>
    %cst_7 = arith.constant 0.000000e+00 : f32
    %23 = vector.broadcast %cst_7 : f32 to vector<10x1xf32>
    %24 = arith.select %22, %16, %23 : vector<10x1xi1>, vector<10x1xf32>
    %25 = vector.shape_cast %24 : vector<10x1xf32> to vector<1x10x1xf32>
    %cst_8 = arith.constant dense<0.000000e+00> : vector<1xf32>
    %26 = vector.multi_reduction <add>, %25, %cst_8 [1, 2] : vector<1x10x1xf32> to vector<1xf32>
    %27 = vector.shape_cast %26 : vector<1xf32> to vector<1x1x1xf32>
    %28 = vector.extract %27[0, 0, 0] : f32 from vector<1x1x1xf32>
    %29 = vector.broadcast %28 : f32 to vector<1x128xf32>
    %c0_9 = arith.constant 0 : index
    %c0_10 = arith.constant 0 : index
    %30 = vector.load %arg2[%c0_9, %c0_10] : memref<1x128xf32, #tpu.memory_space<vmem>>, vector<1x128xf32>
    tpu.vector_store %arg2[%c0_9, %c0_10], %29 {strides = array<i32>} : memref<1x128xf32, #tpu.memory_space<vmem>>, vector<1x128xf32>,
    return
  }
  func.func @transform_0(%arg0: i32) -> (i32, i32, i32) {
    %c0_i32 = arith.constant 0 : i32
    %c0_i32_0 = arith.constant 0 : i32
    %c0_i32_1 = arith.constant 0 : i32
    return %arg0, %c0_i32, %c0_i32_0 : i32, i32, i32
  }
  func.func @transform_1(%arg0: i32) -> (i32, i32) {
    %c0_i32 = arith.constant 0 : i32
    %c0_i32_0 = arith.constant 0 : i32
    return %arg0, %c0_i32 : i32, i32
  }
}

</mosaic_0001>

<llo_original>
// kernel: tpu_custom_call.1
$region0: #{tpu_custom_call.1}
  #allocation0 [shape = 'u32[]', space=smem, size = 0x4, offset = 0x4, fixed_abs, tag = 'smem constant byte address 0x4 - core index']
  #allocation1 [shape = 'u32[144,128]{1,0:T(1,128)}', space=vmem, size = 0x12000, scoped, tag = 'internal scratch']
  %s0 = inlined_call_operand.hbm [shape: f32[10,4,128], index: 0, kind: input, shape index: {}]
  %s1 = inlined_call_operand.hbm [shape: f32[1,128], index: 1, kind: output, shape index: {}]
  %s2 = sld [smem:[#allocation0]]
  $region18: #{tpu_custom_call.1} parent=0
    _
  %s4 = ssub.s32 1, %s2
  %s5 = scalar_select 0, %s4, %s2
  $region1: #{tpu_custom_call.1} parent=0
    #allocation2 [shape = 'u8[20480]{0}', space=vmem, size = 0x5000, scoped, tag = 'input window, operand 0, single buffered']
    #allocation3 [shape = 's32[1]{0}', space=sflag, size = 0x4, scoped, tag = 'scoped memory for tpu_custom_call.1']
    #allocation4 [shape = 's32[1]{0}', space=sflag, size = 0x4, scoped, tag = 'scoped memory for tpu_custom_call.1']
    #allocation5 [shape = 'u8[512]{0}', space=vmem, size = 0x400, scoped, tag = 'output window, operand 0, single buffered']
    %6 = vsyncpa [#allocation3], 0
    %7 = vsyncpa [#allocation4], 0
    // Predicated region
    $region2: #{tpu_custom_call.1} parent=1 // pred_check
      _
    $region3: #{tpu_custom_call.1} parent=1 // pred_check_branch
      %9 = sbr.rel (0) target = $region5
    $region4: #{tpu_custom_call.1} parent=1 // pred_region
      %s11 = ssub.s32 640, 640
      %12 = vsyncadd [#allocation3], %s11
      %s13 = sshll.u32 [#allocation2], 4
      %s14 = int_to_ptr.vmem [resolvable:$true] %s13
      %19 = dma.hbm_to_vmem [thread:$0]  %s0, 640, %s14, [#allocation3], 64, 64, 4
    $region5: #{tpu_custom_call.1} parent=1 // pred_fallthru
      _
    // Predicated region
    $region6: #{tpu_custom_call.1} parent=1 // pred_check
      _
    $region7: #{tpu_custom_call.1} parent=1 // pred_check_branch
      %21 = sbr.rel (0) target = $region9
    $region8: #{tpu_custom_call.1} parent=1 // pred_region
      %22 = dma.done [#allocation3], 640
    $region9: #{tpu_custom_call.1} parent=1 // pred_fallthru
      _
    %v23 = vld [vmem:[#allocation2] sm:$0xf]
    %v24 = vld [vmem:[#allocation2 + $0x4] sm:$0xf]
    %v25 = vld [vmem:[#allocation2 + $0x8] sm:$0xf]
    %v26 = vld [vmem:[#allocation2 + $0xc] sm:$0xf]
    %v27 = vld [vmem:[#allocation2 + $0x10] sm:$0xf]
    %v28 = vld [vmem:[#allocation2 + $0x14] sm:$0xf]
    %v29 = vld [vmem:[#allocation2 + $0x18] sm:$0xf]
    %v30 = vld [vmem:[#allocation2 + $0x1c] sm:$0xf]
    %v31 = vld [vmem:[#allocation2 + $0x20] sm:$0xf]
    %v32 = vld [vmem:[#allocation2 + $0x24] sm:$0xf]
    %v33 = vmul.f32 %v23, %v23
    %v34 = vmul.f32 %v24, %v24
    %v35 = vmul.f32 %v25, %v25
    %v36 = vmul.f32 %v26, %v26
    %v37 = vmul.f32 %v27, %v27
    %v38 = vmul.f32 %v28, %v28
    %v39 = vmul.f32 %v29, %v29
    %v40 = vmul.f32 %v30, %v30
    %v41 = vmul.f32 %v31, %v31
    %v42 = vmul.f32 %v32, %v32
    %vm43 = vcmask 1043456
    %v44 = vsel %vm43, %v33, 0.0
    %45 = vadd.xlane.f32.xlu0 %v44
    %v46 = vpop.xlane.xlu0 %45
    %v47 = vsel %vm43, %v34, 0.0
    %48 = vadd.xlane.f32.xlu0 %v47
    %v49 = vpop.xlane.xlu0 %48
    %v50 = vsel %vm43, %v35, 0.0
    %51 = vadd.xlane.f32.xlu0 %v50
    %v52 = vpop.xlane.xlu0 %51
    %v53 = vsel %vm43, %v36, 0.0
    %54 = vadd.xlane.f32.xlu0 %v53
    %v55 = vpop.xlane.xlu0 %54
    %v56 = vsel %vm43, %v37, 0.0
    %57 = vadd.xlane.f32.xlu0 %v56
    %v58 = vpop.xlane.xlu0 %57
    %v59 = vsel %vm43, %v38, 0.0
    %60 = vadd.xlane.f32.xlu0 %v59
    %v61 = vpop.xlane.xlu0 %60
    %v62 = vsel %vm43, %v39, 0.0
    %63 = vadd.xlane.f32.xlu0 %v62
    %v64 = vpop.xlane.xlu0 %63
    %v65 = vsel %vm43, %v40, 0.0
    %66 = vadd.xlane.f32.xlu0 %v65
    %v67 = vpop.xlane.xlu0 %66
    %v68 = vsel %vm43, %v41, 0.0
    %69 = vadd.xlane.f32.xlu0 %v68
    %v70 = vpop.xlane.xlu0 %69
    %v71 = vsel %vm43, %v42, 0.0
    %72 = vadd.xlane.f32.xlu0 %v71
    %v73 = vpop.xlane.xlu0 %72
    %v74 = vmax.f32 %v46, 1e-24
    %v75 = vmax.f32 %v49, 1e-24
    %v76 = vmax.f32 %v52, 1e-24
    %v77 = vmax.f32 %v55, 1e-24
    %v78 = vmax.f32 %v58, 1e-24
    %v79 = vmax.f32 %v61, 1e-24
    %v80 = vmax.f32 %v64, 1e-24
    %v81 = vmax.f32 %v67, 1e-24
    %v82 = vmax.f32 %v70, 1e-24
    %v83 = vmax.f32 %v73, 1e-24
    %v84 = vrsqrt.pop %v74
    %v85 = vrsqrt.pop %v75
    %v86 = vrsqrt.pop %v76
    %v87 = vrsqrt.pop %v77
    %v88 = vrsqrt.pop %v78
    %v89 = vrsqrt.pop %v79
    %v90 = vrsqrt.pop %v80
    %v91 = vrsqrt.pop %v81
    %v92 = vrsqrt.pop %v82
    %v93 = vrsqrt.pop %v83
    %v94 = vmul.f32 %v23, %v84
    %v95 = vmul.f32 %v24, %v85
    %v96 = vmul.f32 %v25, %v86
    %v97 = vmul.f32 %v26, %v87
    %v98 = vmul.f32 %v27, %v88
    %v99 = vmul.f32 %v28, %v89
    %v100 = vmul.f32 %v29, %v90
    %v101 = vmul.f32 %v30, %v91
    %v102 = vmul.f32 %v31, %v92
    %v103 = vmul.f32 %v32, %v93
    %v104 = vsel %vm43, %v94, 0.0
    %v105 = vrot.slane %v104, 4
    %v106 = vadd.f32 %v104, %v105
    %v107 = vrot.slane %v106, 2
    %v108 = vadd.f32 %v106, %v107
    %v109 = vrot.slane %v108, 1
    %v110 = vadd.f32 %v108, %v109
    %v111 = vsel %vm43, %v95, 0.0
    %v112 = vrot.slane %v111, 4
    %v113 = vadd.f32 %v111, %v112
    %v114 = vrot.slane %v113, 2
    %v115 = vadd.f32 %v113, %v114
    %v116 = vrot.slane %v115, 1
    %v117 = vadd.f32 %v115, %v116
    %v118 = vsel %vm43, %v96, 0.0
    %v119 = vrot.slane %v118, 4
    %v120 = vadd.f32 %v118, %v119
    %v121 = vrot.slane %v120, 2
    %v122 = vadd.f32 %v120, %v121
    %v123 = vrot.slane %v122, 1
    %v124 = vadd.f32 %v122, %v123
    %v125 = vsel %vm43, %v97, 0.0
    %v126 = vrot.slane %v125, 4
    %v127 = vadd.f32 %v125, %v126
    %v128 = vrot.slane %v127, 2
    %v129 = vadd.f32 %v127, %v128
    %v130 = vrot.slane %v129, 1
    %v131 = vadd.f32 %v129, %v130
    %v132 = vsel %vm43, %v98, 0.0
    %v133 = vrot.slane %v132, 4
    %v134 = vadd.f32 %v132, %v133
    %v135 = vrot.slane %v134, 2
    %v136 = vadd.f32 %v134, %v135
    %v137 = vrot.slane %v136, 1
    %v138 = vadd.f32 %v136, %v137
    %v139 = vsel %vm43, %v99, 0.0
    %v140 = vrot.slane %v139, 4
    %v141 = vadd.f32 %v139, %v140
    %v142 = vrot.slane %v141, 2
    %v143 = vadd.f32 %v141, %v142
    %v144 = vrot.slane %v143, 1
    %v145 = vadd.f32 %v143, %v144
    %v146 = vsel %vm43, %v100, 0.0
    %v147 = vrot.slane %v146, 4
    %v148 = vadd.f32 %v146, %v147
    %v149 = vrot.slane %v148, 2
    %v150 = vadd.f32 %v148, %v149
    %v151 = vrot.slane %v150, 1
    %v152 = vadd.f32 %v150, %v151
    %v153 = vsel %vm43, %v101, 0.0
    %v154 = vrot.slane %v153, 4
    %v155 = vadd.f32 %v153, %v154
    %v156 = vrot.slane %v155, 2
    %v157 = vadd.f32 %v155, %v156
    %v158 = vrot.slane %v157, 1
    %v159 = vadd.f32 %v157, %v158
    %v160 = vsel %vm43, %v102, 0.0
    %v161 = vrot.slane %v160, 4
    %v162 = vadd.f32 %v160, %v161
    %v163 = vrot.slane %v162, 2
    %v164 = vadd.f32 %v162, %v163
    %v165 = vrot.slane %v164, 1
    %v166 = vadd.f32 %v164, %v165
    %v167 = vsel %vm43, %v103, 0.0
    %v168 = vrot.slane %v167, 4
    %v169 = vadd.f32 %v167, %v168
    %v170 = vrot.slane %v169, 2
    %v171 = vadd.f32 %v169, %v170
    %v172 = vrot.slane %v171, 1
    %v173 = vadd.f32 %v171, %v172
    %v174 = vmul.f32 %v110, %v110
    %v175 = vmul.f32 %v117, %v117
    %v176 = vmul.f32 %v124, %v124
    %v177 = vmul.f32 %v131, %v131
    %v178 = vmul.f32 %v138, %v138
    %v179 = vmul.f32 %v145, %v145
    %v180 = vmul.f32 %v152, %v152
    %v181 = vmul.f32 %v159, %v159
    %v182 = vmul.f32 %v166, %v166
    %v183 = vmul.f32 %v173, %v173
    %vm194 = vcmask 1041409
    %v195 = vsel %vm194, %v175, %v174
    %vm196 = vcmask 1042434
    %v197 = vsel %vm196, %v176, %v195
    %vm198 = vcmask 1043459
    %v199 = vsel %vm198, %v177, %v197
    %vm200 = vcmask 1044484
    %v201 = vsel %vm200, %v178, %v199
    %vm202 = vcmask 1045509
    %v203 = vsel %vm202, %v179, %v201
    %vm204 = vcmask 1046534
    %v205 = vsel %vm204, %v180, %v203
    %vm206 = vcmask 1047559
    %v207 = vsel %vm206, %v181, %v205
    %v208 = vsel %vm194, %v183, %v182
    %211 = vadd.xlane.f32.xlu0 %v207
    %v212 = vpop.xlane.xlu0 %211
    %vm213 = vcmask 1041408
    %v214 = vsel %vm213, %v208, 0.0
    %215 = vadd.xlane.f32.xlu0 %v214
    %v216 = vpop.xlane.xlu0 %215
    %v217 = vmul.f32 %v46, %v84
    %v218 = vmul.f32 %v49, %v85
    %v219 = vmul.f32 %v52, %v86
    %v220 = vmul.f32 %v55, %v87
    %v221 = vmul.f32 %v58, %v88
    %v222 = vmul.f32 %v61, %v89
    %v223 = vmul.f32 %v64, %v90
    %v224 = vmul.f32 %v67, %v91
    %v225 = vmul.f32 %v70, %v92
    %v226 = vmul.f32 %v73, %v93
    %v227 = vmul.f32 %v217, %v84
    %v228 = vmul.f32 %v218, %v85
    %v229 = vmul.f32 %v219, %v86
    %v230 = vmul.f32 %v220, %v87
    %v231 = vmul.f32 %v221, %v88
    %v232 = vmul.f32 %v222, %v89
    %v233 = vmul.f32 %v223, %v90
    %v234 = vmul.f32 %v224, %v91
    %v235 = vmul.f32 %v225, %v92
    %v236 = vmul.f32 %v226, %v93
    %v237 = vsel %vm43, %v227, 0.0
    %v238 = vrot.slane %v237, 4
    %v239 = vadd.f32 %v237, %v238
    %v240 = vrot.slane %v239, 2
    %v241 = vadd.f32 %v239, %v240
    %v242 = vrot.slane %v241, 1
    %v243 = vadd.f32 %v241, %v242
    %v244 = vsel %vm43, %v228, 0.0
    %v245 = vrot.slane %v244, 4
    %v246 = vadd.f32 %v244, %v245
    %v247 = vrot.slane %v246, 2
    %v248 = vadd.f32 %v246, %v247
    %v249 = vrot.slane %v248, 1
    %v250 = vadd.f32 %v248, %v249
    %v251 = vsel %vm43, %v229, 0.0
    %v252 = vrot.slane %v251, 4
    %v253 = vadd.f32 %v251, %v252
    %v254 = vrot.slane %v253, 2
    %v255 = vadd.f32 %v253, %v254
    %v256 = vrot.slane %v255, 1
    %v257 = vadd.f32 %v255, %v256
    %v258 = vsel %vm43, %v230, 0.0
    %v259 = vrot.slane %v258, 4
    %v260 = vadd.f32 %v258, %v259
    %v261 = vrot.slane %v260, 2
    %v262 = vadd.f32 %v260, %v261
    %v263 = vrot.slane %v262, 1
    %v264 = vadd.f32 %v262, %v263
    %v265 = vsel %vm43, %v231, 0.0
    %v266 = vrot.slane %v265, 4
    %v267 = vadd.f32 %v265, %v266
    %v268 = vrot.slane %v267, 2
    %v269 = vadd.f32 %v267, %v268
    %v270 = vrot.slane %v269, 1
    %v271 = vadd.f32 %v269, %v270
    %v272 = vsel %vm43, %v232, 0.0
    %v273 = vrot.slane %v272, 4
    %v274 = vadd.f32 %v272, %v273
    %v275 = vrot.slane %v274, 2
    %v276 = vadd.f32 %v274, %v275
    %v277 = vrot.slane %v276, 1
    %v278 = vadd.f32 %v276, %v277
    %v279 = vsel %vm43, %v233, 0.0
    %v280 = vrot.slane %v279, 4
    %v281 = vadd.f32 %v279, %v280
    %v282 = vrot.slane %v281, 2
    %v283 = vadd.f32 %v281, %v282
    %v284 = vrot.slane %v283, 1
    %v285 = vadd.f32 %v283, %v284
    %v286 = vsel %vm43, %v234, 0.0
    %v287 = vrot.slane %v286, 4
    %v288 = vadd.f32 %v286, %v287
    %v289 = vrot.slane %v288, 2
    %v290 = vadd.f32 %v288, %v289
    %v291 = vrot.slane %v290, 1
    %v292 = vadd.f32 %v290, %v291
    %v293 = vsel %vm43, %v235, 0.0
    %v294 = vrot.slane %v293, 4
    %v295 = vadd.f32 %v293, %v294
    %v296 = vrot.slane %v295, 2
    %v297 = vadd.f32 %v295, %v296
    %v298 = vrot.slane %v297, 1
    %v299 = vadd.f32 %v297, %v298
    %v300 = vsel %vm43, %v236, 0.0
    %v301 = vrot.slane %v300, 4
    %v302 = vadd.f32 %v300, %v301
    %v303 = vrot.slane %v302, 2
    %v304 = vadd.f32 %v302, %v303
    %v305 = vrot.slane %v304, 1
    %v306 = vadd.f32 %v304, %v305
    %v317 = vsel %vm194, %v250, %v243
    %v318 = vsel %vm196, %v257, %v317
    %v319 = vsel %vm198, %v264, %v318
    %v320 = vsel %vm200, %v271, %v319
    %v321 = vsel %vm202, %v278, %v320
    %v322 = vsel %vm204, %v285, %v321
    %v323 = vsel %vm206, %v292, %v322
    %v324 = vsel %vm194, %v306, %v299
    %v327 = vsub.f32 %v212, %v323
    %v328 = vsub.f32 %v216, %v324
    %s329 = smul.u32 0, 10
    %v330 = vlaneseq
    %v331 = vshrl.u32 %v330, 7
    %v332 = vadd.s32 %v331, 8
    %v333 = vstv %s329
    %v334 = vadd.s32 %v333, %v331
    %v335 = vadd.s32 %v333, %v332
    %vm336 = vcmp.lt.s32.totalorder %v334, 10
    %vm337 = vcmp.lt.s32.totalorder %v335, 10
    %v338 = vsel %vm336, %v327, 0.0
    %v339 = vsel %vm337, %v328, 0.0
    %vm340 = vcmask 7168
    %v341 = vsel %vm340, %v338, 0.0
    %vm342 = vcmask 1024
    %v343 = vsel %vm342, %v339, 0.0
    %v344 = vadd.f32 %v341, %v343
    %345 = vadd.xlane.f32.xlu0 %v344
    %v346 = vpop.xlane.xlu0 %345
    %v347 = vrot.slane %v346, 4
    %v348 = vadd.f32 %v346, %v347
    %v349 = vrot.slane %v348, 2
    %v350 = vadd.f32 %v348, %v349
    %v351 = vrot.slane %v350, 1
    %v352 = vadd.f32 %v350, %v351
    %s353 = vtos %v352
    %v354 = vstv %s353
    %355 = vst [vmem:[#allocation5] sm:$0x1] %v354
    // Predicated region
    $region10: #{tpu_custom_call.1} parent=1 // pred_check
      _
    $region11: #{tpu_custom_call.1} parent=1 // pred_check_branch
      %357 = sbr.rel (0) target = $region13
    $region12: #{tpu_custom_call.1} parent=1 // pred_region
      %s359 = ssub.s32 16, 16
      %360 = vsyncadd [#allocation4], %s359
      %s362 = sshll.u32 [#allocation5], 4
      %s363 = int_to_ptr.vmem [resolvable:$true] %s362
      %365 = dma.vmem_to_hbm [thread:$0]  %s363, 16, %s1, [#allocation4]
    $region13: #{tpu_custom_call.1} parent=1 // pred_fallthru
      _
    // Predicated region
    $region14: #{tpu_custom_call.1} parent=1 // pred_check
      _
    $region15: #{tpu_custom_call.1} parent=1 // pred_check_branch
      %367 = sbr.rel (0) target = $region17
    $region16: #{tpu_custom_call.1} parent=1 // pred_region
      %368 = dma.done [#allocation4], 16
    $region17: #{tpu_custom_call.1} parent=1 // pred_fallthru
      _
    %369 = vsyncpa [#allocation3], 1
    %370 = vsyncpa [#allocation4], 1

</llo_original>
